<compile_context>
chip_gen: v7x
topology: tpu7x:2x2x1
jax: 0.10.0
libtpu: 0.0.40
codegen_flags: <defaults>
</compile_context>

<pallas_src>
import jax
import jax.numpy as jnp
from jax.experimental import pallas as pl
from jax.experimental.pallas import tpu as pltpu


def _decoder_kernel(x_ref, w_ref, b_ref, o_ref):
    # x_ref: (TN, C, H*W)  native dtype (streamed)
    # w_ref: (C, NCP)      f32, transposed Linear weight pre-scaled by 1/(H*W)
    # b_ref: (1, NCP)      f32
    # o_ref: (TN, NCP)
    x = x_ref[...].astype(jnp.float32)            # f32 accumulation for the reduce
    pooled = jnp.sum(x, axis=-1)                  # (TN, C); 1/(H*W) already in w
    out = jnp.dot(pooled, w_ref[...], preferred_element_type=jnp.float32)
    o_ref[...] = (out + b_ref[...]).astype(o_ref.dtype)


def _choose_batch_tile(n, c, hw, itemsize):
    """Largest batch tile whose input block stays within a conservative VMEM budget."""
    budget = 6 * 1024 * 1024                      # ~6 MiB per input block (x2 double-buffer)
    per_sample = max(1, c * hw * itemsize)
    tn = max(1, budget // per_sample)
    if tn >= n:
        return n                                  # full batch fits: single or few blocks
    # Output block is (TN, NCP): keep its second-to-last dim 8-aligned.
    tn = max(8, (tn // 8) * 8)
    return min(tn, n)


def resnet_decoder(x_nchw, weight, bias):
    """x_nchw: (N, C, H, W); weight: (n_classes, C); bias: (n_classes,)."""
    N, C, H, W = x_nchw.shape
    n_classes = weight.shape[0]
    HW = H * W

    x_flat = x_nchw.reshape(N, C, HW)             # keep native dtype (no wrapper upcast)
    out_dtype = jnp.result_type(x_nchw.dtype, weight.dtype)

    # Fold the 1/(H*W) average into the weights; pad class/lane dim to a multiple of 128.
    ncp = ((n_classes + 127) // 128) * 128
    w_scaled = weight.T.astype(jnp.float32) * (1.0 / HW)             # (C, n_classes)
    w_pad = jnp.zeros((C, ncp), jnp.float32).at[:, :n_classes].set(w_scaled)
    b_pad = jnp.zeros((1, ncp), jnp.float32).at[:, :n_classes].set(
        bias.astype(jnp.float32).reshape(1, n_classes))

    TN = _choose_batch_tile(N, C, HW, x_flat.dtype.itemsize)
    grid = (pl.cdiv(N, TN),)

    # TODO(synk): for very large H*W (one sample's (C, H*W) block exceeding the VMEM
    # budget), add a second "arbitrary" grid axis over H*W with a (TN, C) f32
    # accumulator scratch (pl.when init / finalize) to decouple VMEM from H*W.
    out_pad = pl.pallas_call(
        _decoder_kernel,
        out_shape=jax.ShapeDtypeStruct((N, ncp), out_dtype),
        grid=grid,
        in_specs=[
            pl.BlockSpec((TN, C, HW), lambda i: (i, 0, 0)),   # streamed, double-buffered
            pl.BlockSpec((C, ncp), lambda i: (0, 0)),         # VMEM-resident weights
            pl.BlockSpec((1, ncp), lambda i: (0, 0)),         # VMEM-resident bias
        ],
        out_specs=pl.BlockSpec((TN, ncp), lambda i: (i, 0)),
        compiler_params=pltpu.CompilerParams(
            dimension_semantics=("parallel",),                # megacore on v7x
            vmem_limit_bytes=32 * 1024 * 1024,
        ),
    )(x_flat, w_pad, b_pad)

    return out_pad[:, :n_classes]


if __name__ == "__main__":
    # Small shapes consistent with the module: batch=2, in_channels=4,
    # spatial=16x16, n_classes=8.
    N, C, H, W = 2, 4, 16, 16
    n_classes = 8

    key = jax.random.PRNGKey(0)
    kx, kw, kb = jax.random.split(key, 3)

    x = jax.random.normal(kx, (N, C, H, W), dtype=jnp.float32)

    # Deterministic nn.Linear-style init: U(-1/sqrt(C), 1/sqrt(C)).
    bound = 1.0 / (C ** 0.5)
    weight = jax.random.uniform(kw, (n_classes, C), minval=-bound, maxval=bound,
                                dtype=jnp.float32)
    bias = jax.random.uniform(kb, (n_classes,), minval=-bound, maxval=bound,
                              dtype=jnp.float32)

    out = resnet_decoder(x, weight, bias)
    out = jax.block_until_ready(out)

    # Pure-JAX reference check (same semantics as the PyTorch forward).
    ref = jnp.mean(x, axis=(2, 3)) @ weight.T + bias
    assert out.shape == (N, n_classes)
    assert jnp.allclose(out, ref, atol=1e-5, rtol=1e-5), "mismatch vs reference"

    print("KERNEL_OK")
</pallas_src>

<mosaic_0001>
module attributes {stable_mosaic.version = 11 : i64} {
  func.func @_decoder_kernel(%arg0: i32, %arg1: memref<2x4x256xf32, #tpu.memory_space<vmem>>, %arg2: memref<4x128xf32, #tpu.memory_space<vmem>>, %arg3: memref<1x128xf32, #tpu.memory_space<vmem>>, %arg4: memref<2x128xf32, #tpu.memory_space<vmem>>) attributes {dimension_semantics = [#tpu.dimension_semantics<parallel>], iteration_bounds = array<i64: 1>, scalar_prefetch = 0 : i64, scratch_operands = 0 : i64, tpu.core_type = #tpu.core_type<tc>, window_params = [{transform_indices = @transform_0, window_bounds = array<i64: 2, 4, 256>}, {pipeline_mode = #tpu.pipeline_mode<synchronous>, transform_indices = @transform_1, window_bounds = array<i64: 4, 128>}, {pipeline_mode = #tpu.pipeline_mode<synchronous>, transform_indices = @transform_2, window_bounds = array<i64: 1, 128>}, {transform_indices = @transform_3, window_bounds = array<i64: 2, 128>}]} {
    %c0 = arith.constant 0 : index
    %c0_0 = arith.constant 0 : index
    %c0_1 = arith.constant 0 : index
    %0 = vector.load %arg1[%c0, %c0_0, %c0_1] : memref<2x4x256xf32, #tpu.memory_space<vmem>>, vector<2x4x256xf32>
    %cst = arith.constant dense<0.000000e+00> : vector<2x4xf32>
    %1 = vector.multi_reduction <add>, %0, %cst [2] : vector<2x4x256xf32> to vector<2x4xf32>
    %c0_2 = arith.constant 0 : index
    %c0_3 = arith.constant 0 : index
    %2 = vector.load %arg2[%c0_2, %c0_3] : memref<4x128xf32, #tpu.memory_space<vmem>>, vector<4x128xf32>
    %cst_4 = arith.constant dense<0.000000e+00> : vector<2x128xf32>
    %3 = tpu.matmul %1, %2, %cst_4 {dimension_numbers = #tpu.dot_dimension_numbers<[1], [0], [0], [1], [0, 0, 1, 1], [], []>} : vector<2x4xf32>, vector<4x128xf32>, vector<2x128xf32> -> vector<2x128xf32>
    %c0_5 = arith.constant 0 : index
    %c0_6 = arith.constant 0 : index
    %4 = vector.load %arg3[%c0_5, %c0_6] : memref<1x128xf32, #tpu.memory_space<vmem>>, vector<1x128xf32>
    %5 = vector.broadcast %4 : vector<1x128xf32> to vector<2x128xf32>
    %6 = arith.addf %3, %5 : vector<2x128xf32>
    %c0_7 = arith.constant 0 : index
    %c0_8 = arith.constant 0 : index
    %7 = vector.load %arg4[%c0_7, %c0_8] : memref<2x128xf32, #tpu.memory_space<vmem>>, vector<2x128xf32>
    tpu.vector_store %arg4[%c0_7, %c0_8], %6 {strides = array<i32>} : memref<2x128xf32, #tpu.memory_space<vmem>>, vector<2x128xf32>,
    return
  }
  func.func @transform_0(%arg0: i32) -> (i32, i32, i32) {
    %c0_i32 = arith.constant 0 : i32
    %c0_i32_0 = arith.constant 0 : i32
    %c0_i32_1 = arith.constant 0 : i32
    return %arg0, %c0_i32, %c0_i32_0 : i32, i32, i32
  }
  func.func @transform_1(%arg0: i32) -> (i32, i32) {
    %c0_i32 = arith.constant 0 : i32
    %c0_i32_0 = arith.constant 0 : i32
    %c0_i32_1 = arith.constant 0 : i32
    return %c0_i32, %c0_i32_0 : i32, i32
  }
  func.func @transform_2(%arg0: i32) -> (i32, i32) {
    %c0_i32 = arith.constant 0 : i32
    %c0_i32_0 = arith.constant 0 : i32
    %c0_i32_1 = arith.constant 0 : i32
    return %c0_i32, %c0_i32_0 : i32, i32
  }
  func.func @transform_3(%arg0: i32) -> (i32, i32) {
    %c0_i32 = arith.constant 0 : i32
    %c0_i32_0 = arith.constant 0 : i32
    return %arg0, %c0_i32 : i32, i32
  }
}

</mosaic_0001>

<llo_original>
// kernel: tpu_custom_call.1
$region0: #{tpu_custom_call.1}
  #allocation0 [shape = 'u32[]', space=smem, size = 0x4, offset = 0x4, fixed_abs, tag = 'smem constant byte address 0x4 - core index']
  #allocation1 [shape = 'u32[144,128]{1,0:T(1,128)}', space=vmem, size = 0x12000, scoped, tag = 'internal scratch']
  %s0 = inlined_call_operand.hbm [shape: f32[2,4,256], index: 0, kind: input, shape index: {}]
  %s1 = inlined_call_operand.hbm [shape: f32[4,128], index: 1, kind: input, shape index: {}]
  %s2 = inlined_call_operand.vmem [shape: f32[1,128], index: 2, kind: input, shape index: {}]
  %s3 = inlined_call_operand.hbm [shape: f32[2,128], index: 3, kind: output, shape index: {}]
  %s4 = sld [smem:[#allocation0]]
  $region30: #{tpu_custom_call.1} parent=0
    _
  %s6 = ssub.s32 1, %s4
  %s7 = scalar_select 0, %s6, %s4
  $region1: #{tpu_custom_call.1} parent=0
    #allocation2 [shape = 'u8[8192]{0}', space=vmem, size = 0x2000, scoped, tag = 'input window, operand 0, single buffered']
    #allocation3 [shape = 's32[1]{0}', space=sflag, size = 0x4, scoped, tag = 'scoped memory for tpu_custom_call.1']
    #allocation4 [shape = 's32[1]{0}', space=sflag, size = 0x4, scoped, tag = 'scoped memory for tpu_custom_call.1']
    #allocation5 [shape = 'u8[2048]{0}', space=vmem, size = 0x800, scoped, tag = 'input window, operand 1, single buffered']
    #allocation6 [shape = 's32[1]{0}', space=sflag, size = 0x4, scoped, tag = 'scoped memory for tpu_custom_call.1']
    #allocation7 [shape = 'u8[1024]{0}', space=vmem, size = 0x400, scoped, tag = 'output window, operand 0, single buffered']
    %8 = vsyncpa [#allocation3], 0
    %9 = vsyncpa [#allocation6], 0
    %10 = vsyncpa [#allocation4], 0
    // Predicated region
    $region2: #{tpu_custom_call.1} parent=1 // pred_check
      _
    $region3: #{tpu_custom_call.1} parent=1 // pred_check_branch
      %12 = sbr.rel (0) target = $region5
    $region4: #{tpu_custom_call.1} parent=1 // pred_region
      %s14 = ssub.s32 256, 256
      %15 = vsyncadd [#allocation3], %s14
      %s16 = sshll.u32 [#allocation2], 4
      %s17 = int_to_ptr.vmem [resolvable:$true] %s16
      %22 = dma.hbm_to_vmem [thread:$0]  %s0, 256, %s17, [#allocation3], 128, 128, 8
    $region5: #{tpu_custom_call.1} parent=1 // pred_fallthru
      _
    // Predicated region
    $region6: #{tpu_custom_call.1} parent=1 // pred_check
      _
    $region7: #{tpu_custom_call.1} parent=1 // pred_check_branch
      %24 = sbr.rel (0) target = $region9
    $region8: #{tpu_custom_call.1} parent=1 // pred_region
      %s26 = ssub.s32 64, 64
      %27 = vsyncadd [#allocation6], %s26
      %s29 = sshll.u32 [#allocation5], 4
      %s30 = int_to_ptr.vmem [resolvable:$true] %s29
      %32 = dma.hbm_to_vmem [thread:$0]  %s1, 64, %s30, [#allocation6]
    $region9: #{tpu_custom_call.1} parent=1 // pred_fallthru
      _
    // Predicated region
    $region10: #{tpu_custom_call.1} parent=1 // pred_check
      _
    $region11: #{tpu_custom_call.1} parent=1 // pred_check_branch
      %34 = sbr.rel (0) target = $region13
    $region12: #{tpu_custom_call.1} parent=1 // pred_region
      _
    $region13: #{tpu_custom_call.1} parent=1 // pred_fallthru
      _
    // Predicated region
    $region14: #{tpu_custom_call.1} parent=1 // pred_check
      _
    $region15: #{tpu_custom_call.1} parent=1 // pred_check_branch
      %36 = sbr.rel (0) target = $region17
    $region16: #{tpu_custom_call.1} parent=1 // pred_region
      %37 = dma.done [#allocation3], 256
    $region17: #{tpu_custom_call.1} parent=1 // pred_fallthru
      _
    // Predicated region
    $region18: #{tpu_custom_call.1} parent=1 // pred_check
      _
    $region19: #{tpu_custom_call.1} parent=1 // pred_check_branch
      %39 = sbr.rel (0) target = $region21
    $region20: #{tpu_custom_call.1} parent=1 // pred_region
      %40 = dma.done [#allocation6], 64
    $region21: #{tpu_custom_call.1} parent=1 // pred_fallthru
      _
    %v41 = vld [vmem:[#allocation2] sm:$0xff]
    %v42 = vld [vmem:[#allocation2 + $0x8] sm:$0xff]
    %v45 = vcombine.high %v41, %v41
    %v46 = vcombine.high %v42, %v42
    %vm49 = vcmask 1043456
    %v50 = vsel %vm49, %v41, 0.0
    %v51 = vsel %vm49, %v45, 0.0
    %v52 = vadd.f32 %v50, %v51
    %53 = vadd.xlane.f32.xlu0 %v52
    %v54 = vpop.xlane.xlu0 %53
    %v55 = vsel %vm49, %v42, 0.0
    %v56 = vsel %vm49, %v46, 0.0
    %v57 = vadd.f32 %v55, %v56
    %58 = vadd.xlane.f32.xlu0 %v57
    %v59 = vpop.xlane.xlu0 %58
    %v60 = vld [vmem:[#allocation5] sm:$0xf]
    %v61 = vld [vmem:[%s2] sm:$0x1]
    %v63 = vlaneseq
    %v64 = vshrl.u32 %v63, 7
    %v65 = vsub.s32 0, %v64
    %v66 = vrot.slane %v61, %v65
    %v70 = vlaneseq
    %v71 = vand.u32 %v70, 127
    %v72 = vlaneseq
    %v73 = vshrl.u32 %v72, 7
    %v74 = vsub.s32 %v71, %v73
    %v75 = vrot.slane %v54, %v74
    %v76 = vlaneseq
    %v77 = vshrl.u32 %v76, 7
    %v78 = vsub.s32 %v71, %v77
    %v79 = vrot.slane %v59, %v78
    %vm80 = vcmask 1041409
    %v81 = vsel %vm80, %v79, %v75
    %vm82 = vcmask 31744
    %v83 = vsel %vm82, %v81, 0
    %v86 = vsel %vm49, %v60, 0
    %88 = vmatprep.subr.mxu0 0.0
    %89 = vmatpush1.msra.mxu0 %v86
    %90 = vmatprep.subr.mxu0 0.0
    %91 = vmatpush1.msra.mxu0 0.0
    %92 = vmatprep.subr.mxu0 0.0
    %93 = vmatpush1.msra.mxu0 0.0
    %94 = vmatprep.subr.mxu0 0.0
    %95 = vmatpush1.msra.mxu0 0.0
    %96 = vmatprep.subr.mxu0 0.0
    %97 = vmatpush1.msra.mxu0 0.0
    %98 = vmatprep.subr.mxu0 0.0
    %99 = vmatpush1.msra.mxu0 0.0
    %100 = vmatprep.subr.mxu0 0.0
    %101 = vmatpush1.msra.mxu0 0.0
    %102 = vmatprep.subr.mxu0 0.0
    %103 = vmatpush1.msra.mxu0 0.0
    %104 = vmatprep.subr.mxu0 0.0
    %105 = vmatpush1.msra.mxu0 0.0
    %106 = vmatprep.subr.mxu0 0.0
    %107 = vmatpush1.msra.mxu0 0.0
    %108 = vmatprep.subr.mxu0 0.0
    %109 = vmatpush1.msra.mxu0 0.0
    %110 = vmatprep.subr.mxu0 0.0
    %111 = vmatpush1.msra.mxu0 0.0
    %112 = vmatprep.subr.mxu0 0.0
    %113 = vmatpush1.msra.mxu0 0.0
    %114 = vmatprep.subr.mxu0 0.0
    %115 = vmatpush1.msra.mxu0 0.0
    %116 = vmatprep.subr.mxu0 0.0
    %117 = vmatpush1.msra.mxu0 0.0
    %118 = vmatprep.subr.mxu0 0.0
    %119 = vmatpush1.msra.mxu0 0.0
    %120 = vmatprep.subr.mxu0 0.0
    %121 = vmatpush1.msra.mxu0 0.0
    %122 = vmatprep.subr.mxu0 0.0
    %123 = vmatpush1.msra.mxu0 0.0
    %124 = vmatprep.subr.mxu0 0.0
    %125 = vmatpush1.msra.mxu0 0.0
    %126 = vmatprep.subr.mxu0 0.0
    %127 = vmatpush1.msra.mxu0 0.0
    %128 = vmatprep.subr.mxu0 0.0
    %129 = vmatpush1.msra.mxu0 0.0
    %130 = vmatprep.subr.mxu0 0.0
    %131 = vmatpush1.msra.mxu0 0.0
    %132 = vmatprep.subr.mxu0 0.0
    %133 = vmatpush1.msra.mxu0 0.0
    %134 = vmatprep.subr.mxu0 0.0
    %135 = vmatpush1.msra.mxu0 0.0
    %136 = vmatprep.subr.mxu0 0.0
    %137 = vmatpush1.msra.mxu0 0.0
    %138 = vmatprep.subr.mxu0 0.0
    %139 = vmatpush1.msra.mxu0 0.0
    %140 = vmatprep.subr.mxu0 0.0
    %141 = vmatpush1.msra.mxu0 0.0
    %142 = vmatprep.subr.mxu0 0.0
    %143 = vmatpush1.msra.mxu0 0.0
    %144 = vmatprep.subr.mxu0 0.0
    %145 = vmatpush1.msra.mxu0 0.0
    %146 = vmatprep.subr.mxu0 0.0
    %147 = vmatpush1.msra.mxu0 0.0
    %148 = vmatprep.subr.mxu0 0.0
    %149 = vmatpush1.msra.mxu0 0.0
    %150 = vmatprep.subr.mxu0 0.0
    %151 = vmatpush1.msra.mxu0 0.0
    %152 = vmatprep.mubr.f32.mxu0 0.0
    %153 = vmatmul.mubr.f32.gmra.mrb[0].mxu0 %v83
    %v154 = vpop.f32.mrb[0].mxu0
    %v155 = vadd.f32 %v66, %v154
    %v156 = vpop.f32.mrb[0].mxu0
    %157 = vdwg.mxu0
    %158 = vst [vmem:[#allocation7] sm:$0x3] %v155
    // Predicated region
    $region22: #{tpu_custom_call.1} parent=1 // pred_check
      _
    $region23: #{tpu_custom_call.1} parent=1 // pred_check_branch
      %160 = sbr.rel (0) target = $region25
    $region24: #{tpu_custom_call.1} parent=1 // pred_region
      %s162 = ssub.s32 32, 32
      %163 = vsyncadd [#allocation4], %s162
      %s165 = sshll.u32 [#allocation7], 4
      %s166 = int_to_ptr.vmem [resolvable:$true] %s165
      %168 = dma.vmem_to_hbm [thread:$0]  %s166, 32, %s3, [#allocation4]
    $region25: #{tpu_custom_call.1} parent=1 // pred_fallthru
      _
    // Predicated region
    $region26: #{tpu_custom_call.1} parent=1 // pred_check
      _
    $region27: #{tpu_custom_call.1} parent=1 // pred_check_branch
      %170 = sbr.rel (0) target = $region29
    $region28: #{tpu_custom_call.1} parent=1 // pred_region
      %171 = dma.done [#allocation4], 32
    $region29: #{tpu_custom_call.1} parent=1 // pred_fallthru
      _
    %172 = vsyncpa [#allocation3], 1
    %173 = vsyncpa [#allocation6], 1
    %174 = vsyncpa [#allocation4], 1

</llo_original>
